<compile_context>
chip_gen: v6e
topology: v6e:2x2x1
jax: 0.10.0
libtpu: 0.0.40
codegen_flags: <defaults>
</compile_context>

<pallas_src>
import jax
import jax.numpy as jnp
from jax import lax
from jax.experimental import pallas as pl
from jax.experimental.pallas import tpu as pltpu

EPS = 1e-5          # nn.BatchNorm2d default eps
NEG_SLOPE = 0.1     # nn.LeakyReLU(0.1)
LANE = 128


def _round_up(x, m):
    return (x + m - 1) // m * m


# --------------------------------------------------------------------------
# Phase 1: tiled conv matmul + per-channel sum / sum-of-squares accumulation
# --------------------------------------------------------------------------
def conv_stats_kernel(patches_ref, w_ref, conv_ref, stats_ref):
    i = pl.program_id(0)

    # MXU matmul: bf16 operands, f32 accumulate. [TM, K] @ [K, C_pad] -> [TM, C_pad]
    conv = jnp.dot(patches_ref[...], w_ref[...],
                   preferred_element_type=jnp.float32)
    conv_ref[...] = conv

    # Per-channel partial sums via the MXU (ones-vector matmuls) so the
    # VPU/XLU stay free of a cross-sublane reduction.
    ones = jnp.ones((1, conv.shape[0]), dtype=jnp.float32)
    s = jnp.dot(ones, conv, preferred_element_type=jnp.float32)           # [1, C_pad]
    sq = jnp.dot(ones, conv * conv, preferred_element_type=jnp.float32)   # [1, C_pad]
    partial = jnp.concatenate([s, sq], axis=0)                            # [2, C_pad]

    @pl.when(i == 0)
    def _():
        stats_ref[...] = jnp.zeros_like(stats_ref)

    stats_ref[...] += partial


# --------------------------------------------------------------------------
# Phase 2: folded BatchNorm affine + LeakyReLU (lane-dense output)
# --------------------------------------------------------------------------
def bn_lrelu_kernel(conv_ref, scale_ref, shift_ref, out_ref):
    y = conv_ref[...] * scale_ref[...] + shift_ref[...]
    out_ref[...] = jnp.where(y > 0, y, NEG_SLOPE * y).astype(out_ref.dtype)


# --------------------------------------------------------------------------
# im2col (plain-JAX glue) -- bf16, zero-padded rows up to m_pad
# --------------------------------------------------------------------------
def _im2col_bf16(x, kh, kw, stride, padding, m_pad):
    """NCHW f32 -> bf16 patch matrix [m_pad, C_in*kh*kw] (C_in, kh, kw order)."""
    n, c, h, w = x.shape
    xb = x.astype(jnp.bfloat16)   # halve the kh*kw-expanded intermediate
    x_p = jnp.pad(xb, ((0, 0), (0, 0), (padding, padding), (padding, padding)))
    h_out = (h + 2 * padding - kh) // stride + 1
    w_out = (w + 2 * padding - kw) // stride + 1
    cols = []
    for i in range(kh):
        for j in range(kw):
            cols.append(x_p[:, :, i:i + stride * h_out:stride,
                            j:j + stride * w_out:stride])
    patches = jnp.stack(cols, axis=0)               # (kh*kw, N, C, Ho, Wo)
    patches = patches.transpose(1, 3, 4, 2, 0)      # (N, Ho, Wo, C, kh*kw)
    patches = patches.reshape(n * h_out * w_out, c * kh * kw)
    m = n * h_out * w_out
    if m_pad > m:
        # zero rows: conv(0-patch) == 0, so they add nothing to sum / sumsq
        patches = jnp.pad(patches, ((0, m_pad - m), (0, 0)))
    return patches, h_out, w_out
# TODO(synk): build patch tiles in-kernel from an NHWC input via halo DMAs
# (memory_space=pl.ANY + make_async_copy) to avoid the materialized im2col.


# --------------------------------------------------------------------------
# Wrapper
# --------------------------------------------------------------------------
def cnnblock_forward(x, weight, gamma, beta, *, stride=1, padding=1, tm=512):
    """x: NCHW f32; weight: OIHW f32; gamma/beta: [C_out] f32 -> NCHW f32."""
    n, c_in, h, w = x.shape
    c_out, _, kh, kw = weight.shape
    k = c_in * kh * kw
    h_out = (h + 2 * padding - kh) // stride + 1
    w_out = (w + 2 * padding - kw) // stride + 1
    m = n * h_out * w_out

    tm = max(16, min(_round_up(tm, 16), _round_up(m, 16)))   # bf16 sublane granularity
    m_pad = _round_up(m, tm)
    c_pad = _round_up(c_out, LANE)                            # lane-dense channels
    grid_m = m_pad // tm

    patches, _, _ = _im2col_bf16(x, kh, kw, stride, padding, m_pad)

    # [K, C_out] -> zero-pad channels to C_pad, bf16 for the MXU.
    w_mat = weight.reshape(c_out, k).T.astype(jnp.float32)
    w_mat = jnp.pad(w_mat, ((0, 0), (0, c_pad - c_out))).astype(jnp.bfloat16)

    vmem_limit = 64 * 1024 * 1024

    flops1 = 2 * m_pad * k * c_pad + 4 * m_pad * c_pad
    bytes1 = m_pad * k * 2 + k * c_pad * 2 + m_pad * c_pad * 4 + 2 * c_pad * 4

    conv, stats = pl.pallas_call(
        conv_stats_kernel,
        out_shape=(jax.ShapeDtypeStruct((m_pad, c_pad), jnp.float32),
                   jax.ShapeDtypeStruct((2, c_pad), jnp.float32)),
        grid_spec=pltpu.PrefetchScalarGridSpec(
            num_scalar_prefetch=0,
            grid=(grid_m,),
            in_specs=[pl.BlockSpec((tm, k), lambda i: (i, 0)),
                      pl.BlockSpec((k, c_pad), lambda i: (0, 0))],
            out_specs=[pl.BlockSpec((tm, c_pad), lambda i: (i, 0)),
                       pl.BlockSpec((2, c_pad), lambda i: (0, 0))]),
        compiler_params=pltpu.CompilerParams(
            # stats block is revisited every step -> reduction-style axis
            dimension_semantics=("arbitrary",),
            vmem_limit_bytes=vmem_limit),
        cost_estimate=pl.CostEstimate(flops=flops1, transcendentals=0,
                                      bytes_accessed=bytes1),
    )(patches, w_mat)

    # Tiny per-channel finalize (O(C_out)): fold BN into scale/shift.
    mean = stats[0] / m                                   # real row count (padded rows add 0)
    var = jnp.maximum(stats[1] / m - mean * mean, 0.0)    # biased (training-mode) variance
    inv_std = lax.rsqrt(var + EPS)
    gamma_p = jnp.pad(gamma.astype(jnp.float32), (0, c_pad - c_out))
    beta_p = jnp.pad(beta.astype(jnp.float32), (0, c_pad - c_out))
    scale = (gamma_p * inv_std).reshape(1, c_pad)
    shift = (beta_p - mean * gamma_p * inv_std).reshape(1, c_pad)

    out = pl.pallas_call(
        bn_lrelu_kernel,
        out_shape=jax.ShapeDtypeStruct((m_pad, c_pad), jnp.float32),
        grid_spec=pltpu.PrefetchScalarGridSpec(
            num_scalar_prefetch=0,
            grid=(grid_m,),
            in_specs=[pl.BlockSpec((tm, c_pad), lambda i: (i, 0)),
                      pl.BlockSpec((1, c_pad), lambda i: (0, 0)),
                      pl.BlockSpec((1, c_pad), lambda i: (0, 0))],
            out_specs=pl.BlockSpec((tm, c_pad), lambda i: (i, 0))),
        compiler_params=pltpu.CompilerParams(
            dimension_semantics=("parallel",),
            vmem_limit_bytes=vmem_limit),
        cost_estimate=pl.CostEstimate(flops=3 * m_pad * c_pad, transcendentals=0,
                                      bytes_accessed=2 * m_pad * c_pad * 4),
    )(conv, scale, shift)

    out = out[:m, :c_out]                                  # drop M / channel padding
    return out.reshape(n, h_out, w_out, c_out).transpose(0, 3, 1, 2)


def _reference(x, weight, gamma, beta, *, stride=1, padding=1):
    conv = lax.conv_general_dilated(
        x, weight, (stride, stride),
        [(padding, padding), (padding, padding)],
        dimension_numbers=('NCHW', 'OIHW', 'NCHW'))
    mean = conv.mean(axis=(0, 2, 3), keepdims=True)
    var = ((conv - mean) ** 2).mean(axis=(0, 2, 3), keepdims=True)
    y = (conv - mean) / jnp.sqrt(var + EPS)
    y = y * gamma.reshape(1, -1, 1, 1) + beta.reshape(1, -1, 1, 1)
    return jnp.where(y > 0, y, NEG_SLOPE * y)


if __name__ == "__main__":
    # Small shapes: batch=2, in_channels=4, spatial=16, out_channels=8,
    # Conv2d(kernel_size=3, stride=1, padding=1)  (typical YOLO CNNBlock kwargs).
    N, C_IN, H, W = 2, 4, 16, 16
    C_OUT, KH, KW = 8, 3, 3

    key = jax.random.PRNGKey(0)
    kx, kw_, kg, kb = jax.random.split(key, 4)
    x = jax.random.normal(kx, (N, C_IN, H, W), dtype=jnp.float32)
    weight = 0.1 * jax.random.normal(kw_, (C_OUT, C_IN, KH, KW), dtype=jnp.float32)
    gamma = 1.0 + 0.1 * jax.random.normal(kg, (C_OUT,), dtype=jnp.float32)
    beta = 0.1 * jax.random.normal(kb, (C_OUT,), dtype=jnp.float32)

    # tm=128 so the test exercises a multi-tile grid (M = 2*16*16 = 512 -> 4 tiles).
    out = cnnblock_forward(x, weight, gamma, beta, stride=1, padding=1, tm=128)
    out = jax.block_until_ready(out)

    ref = _reference(x, weight, gamma, beta, stride=1, padding=1)
    assert out.shape == (N, C_OUT, H, W), out.shape
    # bf16 MXU operands (f32 accumulate) -> slightly looser tolerance than pure f32.
    assert jnp.allclose(out, ref, atol=2e-2, rtol=2e-2), \
        float(jnp.max(jnp.abs(out - ref)))

    print("KERNEL_OK")
</pallas_src>

<mosaic_0001>
module attributes {stable_mosaic.version = 11 : i64} {
  func.func @conv_stats_kernel(%arg0: i32, %arg1: memref<128x36xbf16, #tpu.memory_space<vmem>>, %arg2: memref<36x128xbf16, #tpu.memory_space<vmem>>, %arg3: memref<128x128xf32, #tpu.memory_space<vmem>>, %arg4: memref<2x128xf32, #tpu.memory_space<vmem>>) attributes {dimension_semantics = [#tpu.dimension_semantics<arbitrary>], iteration_bounds = array<i64: 4>, scalar_prefetch = 0 : i64, scratch_operands = 0 : i64, tpu.core_type = #tpu.core_type<tc>, window_params = [{transform_indices = @transform_0, window_bounds = array<i64: 128, 36>}, {pipeline_mode = #tpu.pipeline_mode<synchronous>, transform_indices = @transform_1, window_bounds = array<i64: 36, 128>}, {transform_indices = @transform_2, window_bounds = array<i64: 128, 128>}, {pipeline_mode = #tpu.pipeline_mode<synchronous>, transform_indices = @transform_3, window_bounds = array<i64: 2, 128>}]} {
    %c0 = arith.constant 0 : index
    %c0_0 = arith.constant 0 : index
    %0 = vector.load %arg1[%c0, %c0_0] : memref<128x36xbf16, #tpu.memory_space<vmem>>, vector<128x36xbf16>
    %c0_1 = arith.constant 0 : index
    %c0_2 = arith.constant 0 : index
    %1 = vector.load %arg2[%c0_1, %c0_2] : memref<36x128xbf16, #tpu.memory_space<vmem>>, vector<36x128xbf16>
    %cst = arith.constant dense<0.000000e+00> : vector<128x128xf32>
    %2 = tpu.matmul %0, %1, %cst {dimension_numbers = #tpu.dot_dimension_numbers<[1], [0], [0], [1], [0, 0, 1, 1], [], []>} : vector<128x36xbf16>, vector<36x128xbf16>, vector<128x128xf32> -> vector<128x128xf32>
    %c0_3 = arith.constant 0 : index
    %c0_4 = arith.constant 0 : index
    %3 = vector.load %arg3[%c0_3, %c0_4] : memref<128x128xf32, #tpu.memory_space<vmem>>, vector<128x128xf32>
    tpu.vector_store %arg3[%c0_3, %c0_4], %2 {strides = array<i32>} : memref<128x128xf32, #tpu.memory_space<vmem>>, vector<128x128xf32>,
    %cst_5 = arith.constant 1.000000e+00 : f32
    %4 = vector.broadcast %cst_5 : f32 to vector<1x128xf32>
    %cst_6 = arith.constant dense<0.000000e+00> : vector<1x128xf32>
    %5 = tpu.matmul %4, %2, %cst_6 {dimension_numbers = #tpu.dot_dimension_numbers<[1], [0], [0], [1], [0, 0, 1, 1], [], []>} : vector<1x128xf32>, vector<128x128xf32>, vector<1x128xf32> -> vector<1x128xf32>
    %6 = arith.mulf %2, %2 : vector<128x128xf32>
    %cst_7 = arith.constant dense<0.000000e+00> : vector<1x128xf32>
    %7 = tpu.matmul %4, %6, %cst_7 {dimension_numbers = #tpu.dot_dimension_numbers<[1], [0], [0], [1], [0, 0, 1, 1], [], []>} : vector<1x128xf32>, vector<128x128xf32>, vector<1x128xf32> -> vector<1x128xf32>
    %8 = tpu.concatenate %5, %7 in 0 : vector<1x128xf32>, vector<1x128xf32> -> vector<2x128xf32>
    %c0_i32 = arith.constant 0 : i32
    %9 = arith.cmpi eq, %arg0, %c0_i32 : i32
    %10 = arith.extui %9 : i1 to i32
    %c0_i32_8 = arith.constant 0 : i32
    %11 = arith.cmpi ne, %10, %c0_i32_8 : i32
    scf.if %11 {
      %cst_13 = arith.constant 0.000000e+00 : f32
      %15 = vector.broadcast %cst_13 : f32 to vector<2x128xf32>
      %c0_14 = arith.constant 0 : index
      %c0_15 = arith.constant 0 : index
      %16 = vector.load %arg4[%c0_14, %c0_15] : memref<2x128xf32, #tpu.memory_space<vmem>>, vector<2x128xf32>
      tpu.vector_store %arg4[%c0_14, %c0_15], %15 {strides = array<i32>} : memref<2x128xf32, #tpu.memory_space<vmem>>, vector<2x128xf32>,
    } else {
    }
    %c0_9 = arith.constant 0 : index
    %c0_10 = arith.constant 0 : index
    %12 = vector.load %arg4[%c0_9, %c0_10] : memref<2x128xf32, #tpu.memory_space<vmem>>, vector<2x128xf32>
    %13 = arith.addf %12, %8 : vector<2x128xf32>
    %c0_11 = arith.constant 0 : index
    %c0_12 = arith.constant 0 : index
    %14 = vector.load %arg4[%c0_11, %c0_12] : memref<2x128xf32, #tpu.memory_space<vmem>>, vector<2x128xf32>
    tpu.vector_store %arg4[%c0_11, %c0_12], %13 {strides = array<i32>} : memref<2x128xf32, #tpu.memory_space<vmem>>, vector<2x128xf32>,
    return
  }
  func.func @transform_0(%arg0: i32) -> (i32, i32) {
    %c0_i32 = arith.constant 0 : i32
    %c0_i32_0 = arith.constant 0 : i32
    return %arg0, %c0_i32 : i32, i32
  }
  func.func @transform_1(%arg0: i32) -> (i32, i32) {
    %c0_i32 = arith.constant 0 : i32
    %c0_i32_0 = arith.constant 0 : i32
    %c0_i32_1 = arith.constant 0 : i32
    return %c0_i32, %c0_i32_0 : i32, i32
  }
  func.func @transform_2(%arg0: i32) -> (i32, i32) {
    %c0_i32 = arith.constant 0 : i32
    %c0_i32_0 = arith.constant 0 : i32
    return %arg0, %c0_i32 : i32, i32
  }
  func.func @transform_3(%arg0: i32) -> (i32, i32) {
    %c0_i32 = arith.constant 0 : i32
    %c0_i32_0 = arith.constant 0 : i32
    %c0_i32_1 = arith.constant 0 : i32
    return %c0_i32, %c0_i32_0 : i32, i32
  }
}

</mosaic_0001>

<llo_original>
// kernel: tpu_custom_call.1
$region0: #{tpu_custom_call.1}
  #allocation0 [shape = 'u32[]', space=smem, size = 0x4, offset = 0x4, fixed_abs, tag = 'smem constant byte address 0x4 - core index']
  #allocation1 [shape = 'u32[144,128]{1,0:T(1,128)}', space=vmem, size = 0x12000, scoped, tag = 'internal scratch']
  %s0 = inlined_call_operand.vmem [shape: bf16[512,36], index: 0, kind: input, shape index: {}]
  %s1 = inlined_call_operand.vmem [shape: bf16[36,128], index: 1, kind: input, shape index: {}]
  %s2 = inlined_call_operand.hbm [shape: f32[512,128], index: 2, kind: output, shape index: {0}]
  %s3 = inlined_call_operand.hbm [shape: f32[2,128], index: 3, kind: output, shape index: {1}]
  %4 = xla_tuple %s2, %s3
  %s5 = sld [smem:[#allocation0]]
  $region53: #{tpu_custom_call.1} parent=0
    _
  %s7 = ssub.s32 1, %s5
  %s8 = scalar_select 0, %s7, %s5
  $region1: #{tpu_custom_call.1} parent=0
    #allocation2 [shape = 'u8[131072]{0}', space=vmem, size = 0x20000, scoped, tag = 'output window, operand 0']
    #allocation3 [shape = 's32[2]{0}', space=sflag, size = 0x8, scoped, tag = 'scoped memory for tpu_custom_call.1']
    #allocation4 [shape = 'u8[1024]{0}', space=vmem, size = 0x400, scoped, tag = 'output window, operand 1, single buffered']
    #allocation5 [shape = 's32[1]{0}', space=sflag, size = 0x4, scoped, tag = 'scoped memory for tpu_custom_call.1']
    %9 = vsyncpa [#allocation3], 0
    %s10 = scalar_lea.sflag [#allocation3], 1
    %11 = vsyncpa %s10, 0
    %12 = vsyncpa [#allocation5], 0
    loop: start=0, step=1, limit=6
    $region2: #{tpu_custom_call.1} parent=1 // loop_pre_header
      _
    $region3: #{tpu_custom_call.1} parent=1 // loop_header
      %s14 = sphi 0, %s18
      %p15 = scmp.ge.s32.totalorder %s14, 6
      %s24 = sphi 0, %s26
      %s27 = sphi 0, %s24
      %s28 = sphi 0, %s27
      %s44 = sphi 0, %s28
      %s48 = sphi 0, %s48
      %s50 = sphi 0, %s48
      %s51 = sphi 0, %s50
      %s65 = sphi 0, %s51
      %s71 = sphi 0, %s73
      %s74 = sphi 0, %s71
      %s75 = sphi 0, %s74
      %s91 = sphi 0, %s75
      %s95 = sphi 0, %s95
      %s97 = sphi 0, %s95
      %s98 = sphi 0, %s97
      %s112 = sphi 0, %s98
    $region4: #{tpu_custom_call.1} parent=1 // loop_header_branch
      %17 = sbr.rel (%p15) target = $region8
    $region5: #{tpu_custom_call.1} parent=1 // loop_body
      %s19 = ssub.s32 %s14, 1
      %s20 = ssub.s32 %s14, 2
      %s21 = sadd.s32 %s14, 1
      %s22 = ssub.s32 %s14, %s21
      %p23 = scmp.eq.s32.totalorder %s22, 0
      %s25 = sadd.s32 %s24, 1
      %s26 = scalar_select %p23, %s24, %s25
      %p29 = pneg %p23
      %p30 = scmp.eq.s32.totalorder %s14, 3
      %p31 = por %p29, %p30
      %p32 = scmp.ne.s32.totalorder %s24, %s27
      %p33 = scmp.eq.s32.totalorder %s14, 0
      %p34 = por %p32, %p33
      %p35 = scmp.ne.s32.totalorder %s24, %s27
      %p36 = scmp.eq.s32.totalorder %s19, 3
      %p37 = por %p35, %p36
      %p38 = scmp.ne.s32.totalorder %s27, %s28
      %p39 = scmp.eq.s32.totalorder %s19, 0
      %p40 = por %p38, %p39
      %p41 = scmp.ne.s32.totalorder %s27, %s28
      %p42 = scmp.eq.s32.totalorder %s20, 3
      %p43 = por %p41, %p42
      %p45 = scmp.ne.s32.totalorder %s28, %s44
      %p46 = scmp.eq.s32.totalorder %s20, 0
      %p47 = por %p45, %p46
      %s49 = sadd.s32 %s48, 1
      %p52 = scmp.eq.s32.totalorder %s14, 3
      %p53 = scmp.ne.s32.totalorder %s48, %s50
      %p54 = scmp.eq.s32.totalorder %s14, 0
      %p55 = por %p53, %p54
      %p56 = scmp.ne.s32.totalorder %s48, %s50
      %p57 = scmp.eq.s32.totalorder %s19, 3
      %p58 = por %p56, %p57
      %p59 = scmp.ne.s32.totalorder %s50, %s51
      %p60 = scmp.eq.s32.totalorder %s19, 0
      %p61 = por %p59, %p60
      %p62 = scmp.ne.s32.totalorder %s50, %s51
      %p63 = scmp.eq.s32.totalorder %s20, 3
      %p64 = por %p62, %p63
      %p66 = scmp.ne.s32.totalorder %s51, %s65
      %p67 = scmp.eq.s32.totalorder %s20, 0
      %p68 = por %p66, %p67
      %s69 = ssub.s32 %s14, %s21
      %p70 = scmp.eq.s32.totalorder %s69, 0
      %s72 = sadd.s32 %s71, 1
      %s73 = scalar_select %p70, %s71, %s72
      %p76 = pneg %p70
      %p77 = scmp.eq.s32.totalorder %s14, 3
      %p78 = por %p76, %p77
      %p79 = scmp.ne.s32.totalorder %s71, %s74
      %p80 = scmp.eq.s32.totalorder %s14, 0
      %p81 = por %p79, %p80
      %p82 = scmp.ne.s32.totalorder %s71, %s74
      %p83 = scmp.eq.s32.totalorder %s19, 3
      %p84 = por %p82, %p83
      %p85 = scmp.ne.s32.totalorder %s74, %s75
      %p86 = scmp.eq.s32.totalorder %s19, 0
      %p87 = por %p85, %p86
      %p88 = scmp.ne.s32.totalorder %s74, %s75
      %p89 = scmp.eq.s32.totalorder %s20, 3
      %p90 = por %p88, %p89
      %p92 = scmp.ne.s32.totalorder %s75, %s91
      %p93 = scmp.eq.s32.totalorder %s20, 0
      %p94 = por %p92, %p93
      %s96 = sadd.s32 %s95, 1
      %p99 = scmp.eq.s32.totalorder %s14, 3
      %p100 = scmp.ne.s32.totalorder %s95, %s97
      %p101 = scmp.eq.s32.totalorder %s14, 0
      %p102 = por %p100, %p101
      %p103 = scmp.ne.s32.totalorder %s95, %s97
      %p104 = scmp.eq.s32.totalorder %s19, 3
      %p105 = por %p103, %p104
      %p106 = scmp.ne.s32.totalorder %s97, %s98
      %p107 = scmp.eq.s32.totalorder %s19, 0
      %p108 = por %p106, %p107
      %p109 = scmp.ne.s32.totalorder %s97, %s98
      %p110 = scmp.eq.s32.totalorder %s20, 3
      %p111 = por %p109, %p110
      %p113 = scmp.ne.s32.totalorder %s98, %s112
      %p114 = scmp.eq.s32.totalorder %s20, 0
      %p115 = por %p113, %p114
      %p116 = scmp.le.s32.totalorder 1, %s14
      %p117 = scmp.lt.s32.totalorder %s14, 5
      %p118 = pnand %p116, %p117
      %p119 = pneg %p118
      // Predicated region
      $region9: #{tpu_custom_call.1} parent=5 // pred_check
        _
      $region10: #{tpu_custom_call.1} parent=5 // pred_check_branch
        %121 = sbr.rel (%p118) target = $region12
      $region11: #{tpu_custom_call.1} parent=5 // pred_region
        %s122 = ssub.s32 %s14, 1
        // Predicated region
        $region13: #{tpu_custom_call.1} parent=11 // pred_check
          %p123 = pneg %p61
        $region14: #{tpu_custom_call.1} parent=11 // pred_check_branch
          %125 = sbr.rel (%p123) target = $region16
        $region15: #{tpu_custom_call.1} parent=11 // pred_region
          _
        $region16: #{tpu_custom_call.1} parent=11 // pred_fallthru
          _
      $region12: #{tpu_custom_call.1} parent=5 // pred_fallthru
        _
      %p126 = scmp.lt.s32.totalorder %s14, 4
      // Predicated region
      $region17: #{tpu_custom_call.1} parent=5 // pred_check
        %p127 = pneg %p126
      $region18: #{tpu_custom_call.1} parent=5 // pred_check_branch
        %129 = sbr.rel (%p127) target = $region20
      $region19: #{tpu_custom_call.1} parent=5 // pred_region
        // Predicated region
        $region21: #{tpu_custom_call.1} parent=19 // pred_check
          %p130 = pneg %p34
        $region22: #{tpu_custom_call.1} parent=19 // pred_check_branch
          %132 = sbr.rel (%p130) target = $region24
        $region23: #{tpu_custom_call.1} parent=19 // pred_region
          %s133 = smul.u32 16, %s14
          %p134 = scmp.lt.s32.totalorder %s133, 63
          %s135 = scalar_select %p134, %s133, 63
          %s136 = smul.addr %s135, 4
          %s137 = scalar_lea.vmem %s0, %s136
          %s138 = smul.u32 16, %s14
        $region24: #{tpu_custom_call.1} parent=19 // pred_fallthru
          _
      $region20: #{tpu_custom_call.1} parent=5 // pred_fallthru
        _
      %p139 = scmp.le.s32.totalorder 1, %s14
      %p140 = scmp.lt.s32.totalorder %s14, 5
      %p141 = pnand %p139, %p140
      %p142 = pneg %p141
      // Predicated region
      $region25: #{tpu_custom_call.1} parent=5 // pred_check
        _
      $region26: #{tpu_custom_call.1} parent=5 // pred_check_branch
        %144 = sbr.rel (%p141) target = $region28
      $region27: #{tpu_custom_call.1} parent=5 // pred_region
        %s145 = ssub.s32 %s14, 1
        %s146 = smul.u32 16, %s19
        %p147 = scmp.lt.s32.totalorder %s146, 63
        %s148 = scalar_select %p147, %s146, 63
        %s149 = smul.addr %s148, 4
        %s150 = scalar_lea.vmem %s0, %s149
        %p151 = pneg %p40
        %p152 = pneg %p37
        %p153 = pneg %p61
        %p154 = pneg %p58
        %p155 = pneg %p87
        %p156 = pneg %p84
        %s157 = sand.u32 %s74, 1
        %s158 = scalar_lea.sflag [#allocation3], %s157
        %s159 = sand.u32 %s74, 1
        %s160 = smul.addr %s159, 128
        %s161 = scalar_lea.vmem [#allocation2], %s160
        %p162 = pneg %p108
        %p163 = pneg %p105
        %s164 = smul.u32 16, %s19
        %p165 = scmp.lt.s32.totalorder %s164, 63
        %s166 = scalar_select %p165, %s164, 63
        %s167 = smul.addr %s166, 4
        %s168 = scalar_lea.vmem %s0, %s167
        %s169 = smul.u32 16, %s19
        %s170 = smul.u32 16, %s19
        %v172 = vld [vmem:[%s168] sm:$0xf]
        %v173 = vld [vmem:[%s168 + $0x4] sm:$0xf]
        %v174 = vld [vmem:[%s168 + $0x8] sm:$0xf]
        %v175 = vld [vmem:[%s168 + $0xc] sm:$0xf]
        %v176 = vld [vmem:[%s168 + $0x10] sm:$0xf]
        %v177 = vld [vmem:[%s168 + $0x14] sm:$0xf]
        %v178 = vld [vmem:[%s168 + $0x18] sm:$0xf]
        %v179 = vld [vmem:[%s168 + $0x1c] sm:$0xf]
        %v180 = vld [vmem:[%s168 + $0x20] sm:$0xf]
        %v181 = vld [vmem:[%s168 + $0x24] sm:$0xf]
        %v182 = vld [vmem:[%s168 + $0x28] sm:$0xf]
        %v183 = vld [vmem:[%s168 + $0x2c] sm:$0xf]
        %v184 = vld [vmem:[%s168 + $0x30] sm:$0xf]
        %v185 = vld [vmem:[%s168 + $0x34] sm:$0xf]
        %v186 = vld [vmem:[%s168 + $0x38] sm:$0xf]
        %v187 = vld [vmem:[%s168 + $0x3c] sm:$0xf]
        %v188 = vld [vmem:[%s1] sm:$0xf]
        %v189 = vld [vmem:[%s1 + $0x4] sm:$0xf]
        %v190 = vld [vmem:[%s1 + $0x8] sm:$0xf]
        %v191 = vld [vmem:[%s1 + $0xc] sm:$0xf]
        %v192 = vld [vmem:[%s1 + $0x10] sm:$0x3]
        %v209 = vunpack.c.l.b16 %v172
        %v210 = vunpack.c.l.b16 %v173
        %v211 = vunpack.c.l.b16 %v174
        %v212 = vunpack.c.l.b16 %v175
        %v213 = vunpack.c.l.b16 %v176
        %v214 = vunpack.c.l.b16 %v177
        %v215 = vunpack.c.l.b16 %v178
        %v216 = vunpack.c.l.b16 %v179
        %v217 = vunpack.c.l.b16 %v180
        %v218 = vunpack.c.l.b16 %v181
        %v219 = vunpack.c.l.b16 %v182
        %v220 = vunpack.c.l.b16 %v183
        %v221 = vunpack.c.l.b16 %v184
        %v222 = vunpack.c.l.b16 %v185
        %v223 = vunpack.c.l.b16 %v186
        %v224 = vunpack.c.l.b16 %v187
        %v225 = vpack.c.b16 %v210, %v209
        %v226 = vpack.c.b16 %v212, %v211
        %v227 = vpack.c.b16 %v214, %v213
        %v228 = vpack.c.b16 %v216, %v215
        %v229 = vpack.c.b16 %v218, %v217
        %v230 = vpack.c.b16 %v220, %v219
        %v231 = vpack.c.b16 %v222, %v221
        %v232 = vpack.c.b16 %v224, %v223
        %v238 = vunpack.c.l.b16 %v188
        %v239 = vunpack.c.l.b16 %v189
        %v240 = vunpack.c.l.b16 %v190
        %v241 = vunpack.c.l.b16 %v191
        %v242 = vunpack.c.l.b16 %v192
        %v243 = vpack.c.b16 %v239, %v238
        %v244 = vpack.c.b16 %v241, %v240
        %v245 = vpack.c.b16 %v242, %v242
        %vm248 = vcmask 293888
        %v250 = vsel %vm248, %v225, 0
        %v253 = vsel %vm248, %v226, 0
        %v256 = vsel %vm248, %v227, 0
        %v259 = vsel %vm248, %v228, 0
        %v262 = vsel %vm248, %v229, 0
        %v265 = vsel %vm248, %v230, 0
        %v268 = vsel %vm248, %v231, 0
        %v271 = vsel %vm248, %v232, 0
        %vm273 = vcmask 1041408
        %v275 = vsel %vm273, %v245, 0
        %277 = vmatprep.subr.bf16.mxu0 0
        %278 = vmatpush1.bf16.msra.mxu0 0
        %279 = vmatprep.subr.bf16.mxu0 0
        %280 = vmatpush1.bf16.msra.mxu0 0
        %281 = vmatprep.subr.bf16.mxu0 0
        %282 = vmatpush1.bf16.msra.mxu0 0
        %283 = vmatprep.subr.bf16.mxu0 0
        %284 = vmatpush1.bf16.msra.mxu0 0
        %285 = vmatprep.subr.bf16.mxu0 0
        %286 = vmatpush1.bf16.msra.mxu0 0
        %287 = vmatprep.subr.bf16.mxu0 0
        %288 = vmatpush1.bf16.msra.mxu0 %v275
        %289 = vmatprep.subr.bf16.mxu0 0
        %290 = vmatpush1.bf16.msra.mxu0 %v244
        %291 = vmatprep.subr.bf16.mxu0 0
        %292 = vmatpush1.bf16.msra.mxu0 %v243
        %293 = vmatprep.subr.bf16.mxu0 0
        %294 = vmatpush2.bf16.msra.mxu0 0
        %295 = vmatprep.subr.bf16.mxu0 0
        %296 = vmatpush2.bf16.msra.mxu0 0
        %297 = vmatprep.subr.bf16.mxu0 0
        %298 = vmatpush2.bf16.msra.mxu0 0
        %299 = vmatprep.subr.bf16.mxu0 0
        %300 = vmatpush2.bf16.msra.mxu0 0
        %301 = vmatprep.subr.bf16.mxu0 0
        %302 = vmatpush2.bf16.msra.mxu0 0
        %303 = vmatprep.subr.bf16.mxu0 0
        %304 = vmatpush2.bf16.msra.mxu0 0
        %305 = vmatprep.subr.bf16.mxu0 0
        %306 = vmatpush2.bf16.msra.mxu0 0
        %307 = vmatprep.subr.bf16.mxu0 0
        %308 = vmatpush2.bf16.msra.mxu0 0
        %309 = vmatprep.mubr.bf16.mxu0 0
        %310 = vmatmul.mubr.bf16.gmra.mxu0 %v250
        %v311 = vpop.f32.mrf.mxu0
        %v312 = vadd.f32 0.0, %v311
        %v313 = vpop.f32.mrf.mxu0
        %v314 = vpop.f32.mrf.mxu0
        %v315 = vadd.f32 0.0, %v314
        %v316 = vpop.f32.mrf.mxu0
        %317 = vmatprep.mubr.bf16.mxu0 0
        %318 = vmatmul.mubr.bf16.gmra.mxu0 %v253
        %v319 = vpop.f32.mrf.mxu0
        %v320 = vadd.f32 0.0, %v319
        %v321 = vpop.f32.mrf.mxu0
        %v322 = vpop.f32.mrf.mxu0
        %v323 = vadd.f32 0.0, %v322
        %v324 = vpop.f32.mrf.mxu0
        %325 = vmatprep.mubr.bf16.mxu0 0
        %326 = vmatmul.mubr.bf16.gmra.mxu0 %v256
        %v327 = vpop.f32.mrf.mxu0
        %v328 = vadd.f32 0.0, %v327
        %v329 = vpop.f32.mrf.mxu0
        %v330 = vpop.f32.mrf.mxu0
        %v331 = vadd.f32 0.0, %v330
        %v332 = vpop.f32.mrf.mxu0
        %333 = vmatprep.mubr.bf16.mxu0 0
        %334 = vmatmul.mubr.bf16.gmra.mxu0 %v259
        %v335 = vpop.f32.mrf.mxu0
        %v336 = vadd.f32 0.0, %v335
        %v337 = vpop.f32.mrf.mxu0
        %v338 = vpop.f32.mrf.mxu0
        %v339 = vadd.f32 0.0, %v338
        %v340 = vpop.f32.mrf.mxu0
        %341 = vmatprep.mubr.bf16.mxu0 0
        %342 = vmatmul.mubr.bf16.gmra.mxu0 %v262
        %v343 = vpop.f32.mrf.mxu0
        %v344 = vadd.f32 0.0, %v343
        %v345 = vpop.f32.mrf.mxu0
        %v346 = vpop.f32.mrf.mxu0
        %v347 = vadd.f32 0.0, %v346
        %v348 = vpop.f32.mrf.mxu0
        %349 = vmatprep.mubr.bf16.mxu0 0
        %350 = vmatmul.mubr.bf16.gmra.mxu0 %v265
        %v351 = vpop.f32.mrf.mxu0
        %v352 = vadd.f32 0.0, %v351
        %v353 = vpop.f32.mrf.mxu0
        %v354 = vpop.f32.mrf.mxu0
        %v355 = vadd.f32 0.0, %v354
        %v356 = vpop.f32.mrf.mxu0
        %357 = vmatprep.mubr.bf16.mxu0 0
        %358 = vmatmul.mubr.bf16.gmra.mxu0 %v268
        %v359 = vpop.f32.mrf.mxu0
        %v360 = vadd.f32 0.0, %v359
        %v361 = vpop.f32.mrf.mxu0
        %v362 = vpop.f32.mrf.mxu0
        %v363 = vadd.f32 0.0, %v362
        %v364 = vpop.f32.mrf.mxu0
        %365 = vmatprep.mubr.bf16.mxu0 0
        %366 = vmatmul.mubr.bf16.gmra.mxu0 %v271
        %v367 = vpop.f32.mrf.mxu0
        %v368 = vadd.f32 0.0, %v367
        %v369 = vpop.f32.mrf.mxu0
        %v370 = vpop.f32.mrf.mxu0
        %v371 = vadd.f32 0.0, %v370
        %v372 = vpop.f32.mrf.mxu0
        %373 = vdwg.mxu0
        %374 = vst [vmem:[%s161] sm:$0xff] %v312
        %375 = vst [vmem:[%s161 + $0x8] sm:$0xff] %v315
        %376 = vst [vmem:[%s161 + $0x10] sm:$0xff] %v320
        %377 = vst [vmem:[%s161 + $0x18] sm:$0xff] %v323
        %378 = vst [vmem:[%s161 + $0x20] sm:$0xff] %v328
        %379 = vst [vmem:[%s161 + $0x28] sm:$0xff] %v331
        %380 = vst [vmem:[%s161 + $0x30] sm:$0xff] %v336
        %381 = vst [vmem:[%s161 + $0x38] sm:$0xff] %v339
        %382 = vst [vmem:[%s161 + $0x40] sm:$0xff] %v344
        %383 = vst [vmem:[%s161 + $0x48] sm:$0xff] %v347
        %384 = vst [vmem:[%s161 + $0x50] sm:$0xff] %v352
        %385 = vst [vmem:[%s161 + $0x58] sm:$0xff] %v355
        %386 = vst [vmem:[%s161 + $0x60] sm:$0xff] %v360
        %387 = vst [vmem:[%s161 + $0x68] sm:$0xff] %v363
        %388 = vst [vmem:[%s161 + $0x70] sm:$0xff] %v368
        %389 = vst [vmem:[%s161 + $0x78] sm:$0xff] %v371
        %390 = vmatprep.subr.mxu0 0.0
        %391 = vmatpush1.msra.mxu0 %v371
        %392 = vmatprep.subr.mxu0 0.0
        %393 = vmatpush1.msra.mxu0 %v368
        %394 = vmatprep.subr.mxu0 0.0
        %395 = vmatpush1.msra.mxu0 %v363
        %396 = vmatprep.subr.mxu0 0.0
        %397 = vmatpush1.msra.mxu0 %v360
        %398 = vmatprep.subr.mxu0 0.0
        %399 = vmatpush1.msra.mxu0 %v355
        %400 = vmatprep.subr.mxu0 0.0
        %401 = vmatpush1.msra.mxu0 %v352
        %402 = vmatprep.subr.mxu0 0.0
        %403 = vmatpush1.msra.mxu0 %v347
        %404 = vmatprep.subr.mxu0 0.0
        %405 = vmatpush1.msra.mxu0 %v344
        %406 = vmatprep.subr.mxu0 0.0
        %407 = vmatpush1.msra.mxu0 %v339
        %408 = vmatprep.subr.mxu0 0.0
        %409 = vmatpush1.msra.mxu0 %v336
        %410 = vmatprep.subr.mxu0 0.0
        %411 = vmatpush1.msra.mxu0 %v331
        %412 = vmatprep.subr.mxu0 0.0
        %413 = vmatpush1.msra.mxu0 %v328
        %414 = vmatprep.subr.mxu0 0.0
        %415 = vmatpush1.msra.mxu0 %v323
        %416 = vmatprep.subr.mxu0 0.0
        %417 = vmatpush1.msra.mxu0 %v320
        %418 = vmatprep.subr.mxu0 0.0
        %419 = vmatpush1.msra.mxu0 %v315
        %420 = vmatprep.subr.mxu0 0.0
        %421 = vmatpush1.msra.mxu0 %v312
        %422 = vmatprep.subr.mxu0 0.0
        %423 = vmatpush2.msra.mxu0 0.0
        %424 = vmatprep.subr.mxu0 0.0
        %425 = vmatpush2.msra.mxu0 0.0
        %426 = vmatprep.subr.mxu0 0.0
        %427 = vmatpush2.msra.mxu0 0.0
        %428 = vmatprep.subr.mxu0 0.0
        %429 = vmatpush2.msra.mxu0 0.0
        %430 = vmatprep.subr.mxu0 0.0
        %431 = vmatpush2.msra.mxu0 0.0
        %432 = vmatprep.subr.mxu0 0.0
        %433 = vmatpush2.msra.mxu0 0.0
        %434 = vmatprep.subr.mxu0 0.0
        %435 = vmatpush2.msra.mxu0 0.0
        %436 = vmatprep.subr.mxu0 0.0
        %437 = vmatpush2.msra.mxu0 0.0
        %438 = vmatprep.subr.mxu0 0.0
        %439 = vmatpush2.msra.mxu0 0.0
        %440 = vmatprep.subr.mxu0 0.0
        %441 = vmatpush2.msra.mxu0 0.0
        %442 = vmatprep.subr.mxu0 0.0
        %443 = vmatpush2.msra.mxu0 0.0
        %444 = vmatprep.subr.mxu0 0.0
        %445 = vmatpush2.msra.mxu0 0.0
        %446 = vmatprep.subr.mxu0 0.0
        %447 = vmatpush2.msra.mxu0 0.0
        %448 = vmatprep.subr.mxu0 0.0
        %449 = vmatpush2.msra.mxu0 0.0
        %450 = vmatprep.subr.mxu0 0.0
        %451 = vmatpush2.msra.mxu0 0.0
        %452 = vmatprep.subr.mxu0 0.0
        %453 = vmatpush2.msra.mxu0 0.0
        %454 = vmatprep.mubr.f32.mxu0 0.0
        %455 = vmatmul.mubr.f32.gmra.mxu0 1.0
        %v456 = vpop.f32.mrf.mxu0
        %v457 = vadd.f32 0.0, %v456
        %v458 = vpop.f32.mrf.mxu0
        %459 = vdwg.mxu0
        %v460 = vmul.f32 %v312, %v312
        %v461 = vmul.f32 %v315, %v315
        %v462 = vmul.f32 %v320, %v320
        %v463 = vmul.f32 %v323, %v323
        %v464 = vmul.f32 %v328, %v328
        %v465 = vmul.f32 %v331, %v331
        %v466 = vmul.f32 %v336, %v336
        %v467 = vmul.f32 %v339, %v339
        %v468 = vmul.f32 %v344, %v344
        %v469 = vmul.f32 %v347, %v347
        %v470 = vmul.f32 %v352, %v352
        %v471 = vmul.f32 %v355, %v355
        %v472 = vmul.f32 %v360, %v360
        %v473 = vmul.f32 %v363, %v363
        %v474 = vmul.f32 %v368, %v368
        %v475 = vmul.f32 %v371, %v371
        %476 = vmatprep.subr.mxu0 0.0
        %477 = vmatpush1.msra.mxu0 %v475
        %478 = vmatprep.subr.mxu0 0.0
        %479 = vmatpush1.msra.mxu0 %v474
        %480 = vmatprep.subr.mxu0 0.0
        %481 = vmatpush1.msra.mxu0 %v473
        %482 = vmatprep.subr.mxu0 0.0
        %483 = vmatpush1.msra.mxu0 %v472
        %484 = vmatprep.subr.mxu0 0.0
        %485 = vmatpush1.msra.mxu0 %v471
        %486 = vmatprep.subr.mxu0 0.0
        %487 = vmatpush1.msra.mxu0 %v470
        %488 = vmatprep.subr.mxu0 0.0
        %489 = vmatpush1.msra.mxu0 %v469
        %490 = vmatprep.subr.mxu0 0.0
        %491 = vmatpush1.msra.mxu0 %v468
        %492 = vmatprep.subr.mxu0 0.0
        %493 = vmatpush1.msra.mxu0 %v467
        %494 = vmatprep.subr.mxu0 0.0
        %495 = vmatpush1.msra.mxu0 %v466
        %496 = vmatprep.subr.mxu0 0.0
        %497 = vmatpush1.msra.mxu0 %v465
        %498 = vmatprep.subr.mxu0 0.0
        %499 = vmatpush1.msra.mxu0 %v464
        %500 = vmatprep.subr.mxu0 0.0
        %501 = vmatpush1.msra.mxu0 %v463
        %502 = vmatprep.subr.mxu0 0.0
        %503 = vmatpush1.msra.mxu0 %v462
        %504 = vmatprep.subr.mxu0 0.0
        %505 = vmatpush1.msra.mxu0 %v461
        %506 = vmatprep.subr.mxu0 0.0
        %507 = vmatpush1.msra.mxu0 %v460
        %508 = vmatprep.subr.mxu0 0.0
        %509 = vmatpush2.msra.mxu0 0.0
        %510 = vmatprep.subr.mxu0 0.0
        %511 = vmatpush2.msra.mxu0 0.0
        %512 = vmatprep.subr.mxu0 0.0
        %513 = vmatpush2.msra.mxu0 0.0
        %514 = vmatprep.subr.mxu0 0.0
        %515 = vmatpush2.msra.mxu0 0.0
        %516 = vmatprep.subr.mxu0 0.0
        %517 = vmatpush2.msra.mxu0 0.0
        %518 = vmatprep.subr.mxu0 0.0
        %519 = vmatpush2.msra.mxu0 0.0
        %520 = vmatprep.subr.mxu0 0.0
        %521 = vmatpush2.msra.mxu0 0.0
        %522 = vmatprep.subr.mxu0 0.0
        %523 = vmatpush2.msra.mxu0 0.0
        %524 = vmatprep.subr.mxu0 0.0
        %525 = vmatpush2.msra.mxu0 0.0
        %526 = vmatprep.subr.mxu0 0.0
        %527 = vmatpush2.msra.mxu0 0.0
        %528 = vmatprep.subr.mxu0 0.0
        %529 = vmatpush2.msra.mxu0 0.0
        %530 = vmatprep.subr.mxu0 0.0
        %531 = vmatpush2.msra.mxu0 0.0
        %532 = vmatprep.subr.mxu0 0.0
        %533 = vmatpush2.msra.mxu0 0.0
        %534 = vmatprep.subr.mxu0 0.0
        %535 = vmatpush2.msra.mxu0 0.0
        %536 = vmatprep.subr.mxu0 0.0
        %537 = vmatpush2.msra.mxu0 0.0
        %538 = vmatprep.subr.mxu0 0.0
        %539 = vmatpush2.msra.mxu0 0.0
        %540 = vmatprep.mubr.f32.mxu0 0.0
        %541 = vmatmul.mubr.f32.gmra.mxu0 1.0
        %v542 = vpop.f32.mrf.mxu0
        %v543 = vadd.f32 0.0, %v542
        %v544 = vpop.f32.mrf.mxu0
        %545 = vdwg.mxu0
        %v547 = vrot.slane %v543, 7
        %vm549 = vcmask 1040384
        %v550 = vsel %vm549, %v457, %v547
        %p551 = scmp.eq.s32.totalorder %s19, 0
        // Predicated region
        $region29: #{tpu_custom_call.1} parent=27 // pred_check
          %p552 = pneg %p551
        $region30: #{tpu_custom_call.1} parent=27 // pred_check_branch
          %554 = sbr.rel (%p552) target = $region32
        $region31: #{tpu_custom_call.1} parent=27 // pred_region
          %555 = vst [vmem:[#allocation4] sm:$0x3] 0.0
        $region32: #{tpu_custom_call.1} parent=27 // pred_fallthru
          _
        %v556 = vld [vmem:[#allocation4] sm:$0x3]
        %v557 = vadd.f32 %v556, %v550
        %558 = vst [vmem:[#allocation4] sm:$0x3] %v557
        %s559 = sand.u32 %s74, 1
        %s560 = scalar_lea.sflag [#allocation3], %s559
        %s561 = sand.u32 %s74, 1
        %s562 = smul.addr %s561, 128
        %s563 = scalar_lea.vmem [#allocation2], %s562
        // Predicated region
        $region33: #{tpu_custom_call.1} parent=27 // pred_check
          %p564 = pneg %p84
        $region34: #{tpu_custom_call.1} parent=27 // pred_check_branch
          %566 = sbr.rel (%p564) target = $region36
        $region35: #{tpu_custom_call.1} parent=27 // pred_region
          %s567 = smul.u32 16, %s19
          %s569 = ssub.s32 2048, 2048
          %570 = vsyncadd %s560, %s569
          %s571 = smul.addr %s567, 128
          %s572 = scalar_lea.hbm %s2, %s571
          %s573 = sshll.u32 %s563, 4
          %s574 = int_to_ptr.vmem [resolvable:$true] %s573
          %579 = dma.vmem_to_hbm [thread:$0]  %s574, 2048, %s572, %s560, 128, 128, 8
        $region36: #{tpu_custom_call.1} parent=27 // pred_fallthru
          _
        // Predicated region
        $region37: #{tpu_custom_call.1} parent=27 // pred_check
          %p580 = pneg %p105
        $region38: #{tpu_custom_call.1} parent=27 // pred_check_branch
          %582 = sbr.rel (%p580) target = $region40
        $region39: #{tpu_custom_call.1} parent=27 // pred_region
          %s584 = ssub.s32 32, 32
          %585 = vsyncadd [#allocation5], %s584
          %s587 = sshll.u32 [#allocation4], 4
          %s588 = int_to_ptr.vmem [resolvable:$true] %s587
          %590 = dma.vmem_to_hbm [thread:$0]  %s588, 32, %s3, [#allocation5]
        $region40: #{tpu_custom_call.1} parent=27 // pred_fallthru
          _
        // Predicated region
        $region41: #{tpu_custom_call.1} parent=27 // pred_check
          %p591 = pneg %p105
        $region42: #{tpu_custom_call.1} parent=27 // pred_check_branch
          %593 = sbr.rel (%p591) target = $region44
        $region43: #{tpu_custom_call.1} parent=27 // pred_region
          %594 = dma.done [#allocation5], 32
        $region44: #{tpu_custom_call.1} parent=27 // pred_fallthru
          _
      $region28: #{tpu_custom_call.1} parent=5 // pred_fallthru
        _
      %p595 = scmp.le.s32.totalorder 2, %s14
      // Predicated region
      $region45: #{tpu_custom_call.1} parent=5 // pred_check
        %p596 = pneg %p595
      $region46: #{tpu_custom_call.1} parent=5 // pred_check_branch
        %598 = sbr.rel (%p596) target = $region48
      $region47: #{tpu_custom_call.1} parent=5 // pred_region
        %s599 = ssub.s32 %s14, 2
        // Predicated region
        $region49: #{tpu_custom_call.1} parent=47 // pred_check
          %p600 = pneg %p90
        $region50: #{tpu_custom_call.1} parent=47 // pred_check_branch
          %602 = sbr.rel (%p600) target = $region52
        $region51: #{tpu_custom_call.1} parent=47 // pred_region
          %s603 = sand.u32 %s75, 1
          %s604 = scalar_lea.sflag [#allocation3], %s603
          %s605 = sand.u32 %s75, 1
          %s606 = smul.addr %s605, 128
          %s607 = scalar_lea.vmem [#allocation2], %s606
          %608 = dma.done %s604, 2048
        $region52: #{tpu_custom_call.1} parent=47 // pred_fallthru
          _
      $region48: #{tpu_custom_call.1} parent=5 // pred_fallthru
        _
    $region6: #{tpu_custom_call.1} parent=1 // loop_footer
      %s18 = sadd.s32 1, %s14
    $region7: #{tpu_custom_call.1} parent=1 // loop_footer_branch
      %13 = sbr.rel target = $region3
    $region8: #{tpu_custom_call.1} parent=1 // loop_exit
      _
    %609 = vsyncpa [#allocation3], 1
    %s610 = scalar_lea.sflag [#allocation3], 1
    %611 = vsyncpa %s610, 1
    %612 = vsyncpa [#allocation5], 1

</llo_original>
